<compile_context>
chip_gen: v6e
topology: v6e:2x2x1
jax: 0.10.0
libtpu: 0.0.40
codegen_flags: <defaults>
</compile_context>

<pallas_src>
import jax
import jax.numpy as jnp
from jax import lax
from jax.experimental import pallas as pl
from jax.experimental.pallas import tpu as pltpu

HIDDEN = 32
ALPHA = 0.5
N_T = 16      # number of "target" nodes
F_T = 12      # raw "target" feature dim
N_C = 8       # number of "context" nodes
F_C = 6       # raw "context" feature dim

N_ALL = N_T + N_C                 # 24 stacked node rows
F_PAD = 24                        # zero-padded feature width (sublane multiple)
M_COLS = 2 * N_T + N_C            # 40 packed mask columns [m_tt | m_tt.T | m_ct]
W_PRE_ROWS = F_PAD                # 24
W_PROJ_ROWS = 2 * HIDDEN          # 64
W_LIN_ROWS = HIDDEN               # 32
W_ROWS = W_PRE_ROWS + W_PROJ_ROWS + W_LIN_ROWS   # 120
W_COLS = 4 * HIDDEN               # 128 (lane-dense weight slab)


# ----------------------------------------------------------------------------
# Fused Pallas kernel: whole HeteroForecastSageConv forward, one graph / step
# ----------------------------------------------------------------------------
def _fused_forward_kernel(x_ref, m_ref, w_ref, b_ref, o_ref):
    f32 = jnp.float32
    H = HIDDEN

    w = w_ref[...]                                   # (120, 128) packed weights
    b = b_ref[...]                                   # (1, 128)   packed biases
    w_pre = w[0:W_PRE_ROWS, 0:2 * H]                 # (24, 64) block-diag pre-transform
    w_proj = w[W_PRE_ROWS:W_PRE_ROWS + W_PROJ_ROWS, :]          # (64, 128) block-diag proj
    w_lin = w[W_PRE_ROWS + W_PROJ_ROWS:W_ROWS, 0:H]             # (32, 32) final Linear
    b_pre = b[:, 0:2 * H]                            # (1, 64) [pre_t_b | pre_c_b]
    b_agg = b[:, 2 * H:3 * H]                        # (1, 32) 0.5*(b_dir + b_ct)
    b_lin = b[:, 3 * H:4 * H]                        # (1, 32)

    # 1. HeteroDictLinear pre-transform + ReLU for BOTH node types in one
    #    block-diagonal (24,24)@(24,64) MXU push. Off-diagonal junk (relu(bias)
    #    broadcast) never reaches the output: it only hits weight blocks that
    #    are zero, or result columns that are sliced away.
    h_all = jnp.maximum(
        jnp.dot(x_ref[...], w_pre, preferred_element_type=f32) + b_pre, 0.0)  # (24, 64)
    h_t = h_all[0:N_T, 0:H]                          # (16, 32) target hidden (skip branch)

    # 2. All hidden->hidden projections in one (24,64)@(64,128) MXU push.
    #    Scalar factors (HeteroConv 0.5, DirSage (1-a)/a) are folded into the
    #    packed weight columns; mean is linear so project-then-aggregate is
    #    exact (biases added post-aggregation, matching PyG).
    proj = jnp.dot(h_all, w_proj, preferred_element_type=f32)                 # (24, 128)
    p_selfct = proj[0:N_T, 0:H]                      # h_t @ 0.5*(self_w + ct_r_w)
    p_s2d = proj[0:N_T, H:2 * H]                     # h_t @ 0.5*(1-a)*s2d_w
    p_d2s = proj[0:N_T, 2 * H:3 * H]                 # h_t @ 0.5*a*d2s_w
    p_ct_l = proj[N_T:N_ALL, 3 * H:4 * H]            # h_c @ 0.5*ct_l_w

    # 3. All three mean aggregations in one (16,40)@(40,32) MXU push.
    #    m_ref = [mask_tt | mask_tt.T | mask_ct]; fold 1/deg into the mask rows
    #    (zero-degree rows stay 0, matching scatter-mean semantics).
    m_all = m_ref[...]                                                         # (16, 40)
    col = lax.broadcasted_iota(jnp.int32, (N_T, M_COLS), 1)
    in_blk = col < N_T
    out_blk = (col >= N_T) & (col < 2 * N_T)
    deg_in = jnp.sum(jnp.where(in_blk, m_all, 0.0), axis=1, keepdims=True)
    deg_out = jnp.sum(jnp.where(out_blk, m_all, 0.0), axis=1, keepdims=True)
    deg_ct = jnp.sum(m_all, axis=1, keepdims=True) - deg_in - deg_out
    inv_in = pl.reciprocal(jnp.maximum(deg_in, 1.0), approx=False)
    inv_out = pl.reciprocal(jnp.maximum(deg_out, 1.0), approx=False)
    inv_ct = pl.reciprocal(jnp.maximum(deg_ct, 1.0), approx=False)
    scale = jnp.where(in_blk, inv_in, jnp.where(out_blk, inv_out, inv_ct))
    m_scaled = m_all * scale                                                   # (16, 40)

    p_big = jnp.concatenate([p_s2d, p_d2s, p_ct_l], axis=0)                    # (40, 32)
    agg = jnp.dot(m_scaled, p_big, preferred_element_type=f32)                 # (16, 32)

    # 4. HeteroConv mean + DirSage blend + biases + skip + ReLU (all scalar
    #    blends already folded into weights/masks: one add chain remains).
    x_new = jnp.maximum(p_selfct + agg + b_agg + h_t, 0.0)

    # 5. Final Linear(hidden, hidden): one (16,32)@(32,32) push.
    o_ref[...] = (jnp.dot(x_new, w_lin, preferred_element_type=f32)
                  + b_lin).astype(o_ref.dtype)


# ----------------------------------------------------------------------------
# One-time parameter packing (host-side algebra, NOT per-call wrapper work)
# ----------------------------------------------------------------------------
def pack_params(p):
    """Pack all weights into one lane-dense (120,128) slab and all biases into
    one (1,128) slab, folding the HeteroConv 0.5 and DirSage alpha factors in."""
    H = HIDDEN
    w_pre = jnp.zeros((W_PRE_ROWS, 2 * H), jnp.float32)
    w_pre = w_pre.at[0:F_T, 0:H].set(p["pre_t_w"])
    w_pre = w_pre.at[F_T:F_T + F_C, H:2 * H].set(p["pre_c_w"])

    w_proj = jnp.zeros((W_PROJ_ROWS, 4 * H), jnp.float32)
    w_proj = w_proj.at[0:H, 0:H].set(0.5 * (p["self_w"] + p["ct_r_w"]))
    w_proj = w_proj.at[0:H, H:2 * H].set(0.5 * (1.0 - ALPHA) * p["s2d_w"])
    w_proj = w_proj.at[0:H, 2 * H:3 * H].set(0.5 * ALPHA * p["d2s_w"])
    w_proj = w_proj.at[H:2 * H, 3 * H:4 * H].set(0.5 * p["ct_l_w"])

    w_slab = jnp.zeros((W_ROWS, W_COLS), jnp.float32)
    w_slab = w_slab.at[0:W_PRE_ROWS, 0:2 * H].set(w_pre)
    w_slab = w_slab.at[W_PRE_ROWS:W_PRE_ROWS + W_PROJ_ROWS, :].set(w_proj)
    w_slab = w_slab.at[W_PRE_ROWS + W_PROJ_ROWS:W_ROWS, 0:H].set(p["lin_w"])

    b_agg = 0.5 * (p["self_b"] + (1.0 - ALPHA) * p["s2d_b"]
                   + ALPHA * p["d2s_b"] + p["ct_l_b"])
    b_slab = jnp.concatenate(
        [p["pre_t_b"], p["pre_c_b"], b_agg, p["lin_b"]]).reshape(1, 4 * H)
    return w_slab, b_slab


# ----------------------------------------------------------------------------
# Batched wrapper: one fused pallas_call, grid over graphs (parallel)
# ----------------------------------------------------------------------------
@jax.jit
def hetero_forecast_sage_forward(x_t, x_c, mask_tt, mask_ct, w_slab, b_slab):
    """Fused forward. Accepts single-graph (2-D) or batched (leading graph dim)
    inputs; masks are dense adjacency mask[dst, src] in {0,1}."""
    squeeze = x_t.ndim == 2
    if squeeze:
        x_t, x_c, mask_tt, mask_ct = (a[None] for a in (x_t, x_c, mask_tt, mask_ct))
    B = x_t.shape[0]

    # Pack per-graph inputs into two lane/sublane-friendly slabs (fused by XLA;
    # cuts per-operand DMA setup inside the grid-less-per-step kernel).
    x_all = jnp.zeros((B, N_ALL, F_PAD), jnp.float32)
    x_all = x_all.at[:, :N_T, :F_T].set(x_t)
    x_all = x_all.at[:, N_T:, F_T:F_T + F_C].set(x_c)
    mask_all = jnp.concatenate(
        [mask_tt, jnp.swapaxes(mask_tt, 1, 2), mask_ct], axis=2)   # (B, 16, 40)

    out = pl.pallas_call(
        _fused_forward_kernel,
        out_shape=jax.ShapeDtypeStruct((B, N_T, HIDDEN), jnp.float32),
        grid_spec=pltpu.PrefetchScalarGridSpec(
            num_scalar_prefetch=0,
            grid=(B,),
            in_specs=[
                pl.BlockSpec((None, N_ALL, F_PAD), lambda b: (b, 0, 0)),
                pl.BlockSpec((None, N_T, M_COLS), lambda b: (b, 0, 0)),
                pl.BlockSpec((W_ROWS, W_COLS), lambda b: (0, 0)),   # resident weights
                pl.BlockSpec((1, W_COLS), lambda b: (0, 0)),        # resident biases
            ],
            out_specs=pl.BlockSpec((None, N_T, HIDDEN), lambda b: (b, 0, 0)),
        ),
        compiler_params=pltpu.CompilerParams(dimension_semantics=("parallel",)),
    )(x_all, mask_all, w_slab, b_slab)
    return out[0] if squeeze else out


# ----------------------------------------------------------------------------
# Pure-JAX reference (PyG order: aggregate raw features, then project)
# ----------------------------------------------------------------------------
def _ref_linear(x, w, b, relu=False):
    y = x @ w + b
    return jnp.maximum(y, 0.0) if relu else y


def _ref_mean_agg(h_src, mask):
    deg = jnp.sum(mask, axis=1, keepdims=True)
    return (mask @ h_src) / jnp.maximum(deg, 1.0)


def ref_forward(x_t, x_c, mask_tt, mask_ct, p):
    h_t = _ref_linear(x_t, p["pre_t_w"], p["pre_t_b"], relu=True)
    h_c = _ref_linear(x_c, p["pre_c_w"], p["pre_c_b"], relu=True)
    res_t = h_t
    # DirSageConv on ("target","rel","target")
    agg_s2d = _ref_mean_agg(h_t, mask_tt)       # in-neighbours (source_to_target)
    agg_d2s = _ref_mean_agg(h_t, mask_tt.T)     # out-neighbours (target_to_source)
    out_dir = (h_t @ p["self_w"] + p["self_b"]
               + (1.0 - ALPHA) * (agg_s2d @ p["s2d_w"] + p["s2d_b"])
               + ALPHA * (agg_d2s @ p["d2s_w"] + p["d2s_b"]))
    # SAGEConv on ("context","to","target")
    agg_ct = _ref_mean_agg(h_c, mask_ct)
    out_ct = agg_ct @ p["ct_l_w"] + p["ct_l_b"] + h_t @ p["ct_r_w"]
    # HeteroConv aggr='mean' + skip + ReLU + final Linear
    x_new = jnp.maximum(0.5 * (out_dir + out_ct) + res_t, 0.0)
    return x_new @ p["lin_w"] + p["lin_b"]


# ----------------------------------------------------------------------------
# Deterministic parameter init
# ----------------------------------------------------------------------------
def _glorot(key, shape):
    fan_in, fan_out = shape[0], shape[-1]
    lim = (6.0 / (fan_in + fan_out)) ** 0.5
    return jax.random.uniform(key, shape, jnp.float32, -lim, lim)


def init_params(key):
    keys = iter(jax.random.split(key, 24))

    def small(k, n):
        return 0.01 * jax.random.normal(k, (n,), jnp.float32)

    return {
        # HeteroDictLinear pre-transform
        "pre_t_w": _glorot(next(keys), (F_T, HIDDEN)),
        "pre_t_b": small(next(keys), HIDDEN),
        "pre_c_w": _glorot(next(keys), (F_C, HIDDEN)),
        "pre_c_b": small(next(keys), HIDDEN),
        # DirSageConv: lin_self, conv_src_to_dst.lin_l, conv_dst_to_src.lin_l
        "self_w": _glorot(next(keys), (HIDDEN, HIDDEN)),
        "self_b": small(next(keys), HIDDEN),
        "s2d_w": _glorot(next(keys), (HIDDEN, HIDDEN)),
        "s2d_b": small(next(keys), HIDDEN),
        "d2s_w": _glorot(next(keys), (HIDDEN, HIDDEN)),
        "d2s_b": small(next(keys), HIDDEN),
        # SAGEConv context->target: lin_l (bias) on aggregated ctx, lin_r (no bias)
        "ct_l_w": _glorot(next(keys), (HIDDEN, HIDDEN)),
        "ct_l_b": small(next(keys), HIDDEN),
        "ct_r_w": _glorot(next(keys), (HIDDEN, HIDDEN)),
        # final Linear(hidden, hidden)
        "lin_w": _glorot(next(keys), (HIDDEN, HIDDEN)),
        "lin_b": small(next(keys), HIDDEN),
    }


# ----------------------------------------------------------------------------
if __name__ == "__main__":
    root = jax.random.PRNGKey(0)
    k_xt, k_xc, k_mtt, k_mct, k_p = jax.random.split(root, 5)

    B = 4  # batch of graphs -> grid axis, split across TCs on v7x
    x_target = jax.random.normal(k_xt, (B, N_T, F_T), jnp.float32)
    x_context = jax.random.normal(k_xc, (B, N_C, F_C), jnp.float32)
    # dense adjacency masks: mask[dst, src] = 1 iff edge src -> dst exists
    mask_tt = jax.random.bernoulli(k_mtt, 0.3, (B, N_T, N_T)).astype(jnp.float32)
    mask_ct = jax.random.bernoulli(k_mct, 0.4, (B, N_T, N_C)).astype(jnp.float32)

    params = init_params(k_p)
    w_slab, b_slab = pack_params(params)

    out = hetero_forecast_sage_forward(x_target, x_context, mask_tt, mask_ct,
                                       w_slab, b_slab)
    out = jax.block_until_ready(out)

    assert out.shape == (B, N_T, HIDDEN), out.shape
    assert bool(jnp.all(jnp.isfinite(out)))
    for g in range(B):
        ref = ref_forward(x_target[g], x_context[g], mask_tt[g], mask_ct[g], params)
        err = float(jnp.max(jnp.abs(out[g] - ref)))
        assert jnp.allclose(out[g], ref, atol=1e-4, rtol=1e-4), (g, err)

    # single-graph (unbatched) path, matching the original module interface
    out1 = hetero_forecast_sage_forward(x_target[0], x_context[0], mask_tt[0],
                                        mask_ct[0], w_slab, b_slab)
    out1 = jax.block_until_ready(out1)
    assert out1.shape == (N_T, HIDDEN)
    assert jnp.allclose(out1, out[0], atol=1e-5, rtol=1e-5)

    print("KERNEL_OK")
</pallas_src>

<mosaic_0001>
module attributes {stable_mosaic.version = 11 : i64} {
  func.func @_fused_forward_kernel(%arg0: i32, %arg1: memref<1x24x24xf32, #tpu.memory_space<vmem>>, %arg2: memref<1x16x40xf32, #tpu.memory_space<vmem>>, %arg3: memref<120x128xf32, #tpu.memory_space<vmem>>, %arg4: memref<1x128xf32, #tpu.memory_space<vmem>>, %arg5: memref<1x16x32xf32, #tpu.memory_space<vmem>>) attributes {dimension_semantics = [#tpu.dimension_semantics<parallel>], iteration_bounds = array<i64: 4>, scalar_prefetch = 0 : i64, scratch_operands = 0 : i64, tpu.core_type = #tpu.core_type<tc>, window_params = [{transform_indices = @transform_0, window_bounds = array<i64: 1, 24, 24>}, {transform_indices = @transform_1, window_bounds = array<i64: 1, 16, 40>}, {pipeline_mode = #tpu.pipeline_mode<synchronous>, transform_indices = @transform_2, window_bounds = array<i64: 120, 128>}, {pipeline_mode = #tpu.pipeline_mode<synchronous>, transform_indices = @transform_3, window_bounds = array<i64: 1, 128>}, {transform_indices = @transform_4, window_bounds = array<i64: 1, 16, 32>}]} {
    %c0 = arith.constant 0 : index
    %c0_0 = arith.constant 0 : index
    %0 = vector.load %arg3[%c0, %c0_0] : memref<120x128xf32, #tpu.memory_space<vmem>>, vector<120x128xf32>
    %c0_1 = arith.constant 0 : index
    %c0_2 = arith.constant 0 : index
    %1 = vector.load %arg4[%c0_1, %c0_2] : memref<1x128xf32, #tpu.memory_space<vmem>>, vector<1x128xf32>
    %2 = vector.extract_strided_slice %0 {offsets = [0, 0], sizes = [24, 64], strides = [1, 1]} : vector<120x128xf32> to vector<24x64xf32>
    %3 = vector.extract_strided_slice %0 {offsets = [24, 0], sizes = [64, 128], strides = [1, 1]} : vector<120x128xf32> to vector<64x128xf32>
    %4 = vector.extract_strided_slice %0 {offsets = [88, 0], sizes = [32, 32], strides = [1, 1]} : vector<120x128xf32> to vector<32x32xf32>
    %5 = vector.extract_strided_slice %1 {offsets = [0, 0], sizes = [1, 64], strides = [1, 1]} : vector<1x128xf32> to vector<1x64xf32>
    %6 = vector.extract_strided_slice %1 {offsets = [0, 64], sizes = [1, 32], strides = [1, 1]} : vector<1x128xf32> to vector<1x32xf32>
    %7 = vector.extract_strided_slice %1 {offsets = [0, 96], sizes = [1, 32], strides = [1, 1]} : vector<1x128xf32> to vector<1x32xf32>
    %c0_3 = arith.constant 0 : index
    %c0_4 = arith.constant 0 : index
    %c0_5 = arith.constant 0 : index
    %8 = vector.load %arg1[%c0_3, %c0_4, %c0_5] : memref<1x24x24xf32, #tpu.memory_space<vmem>>, vector<1x24x24xf32>
    %9 = vector.shape_cast %8 : vector<1x24x24xf32> to vector<24x24xf32>
    %cst = arith.constant dense<0.000000e+00> : vector<24x64xf32>
    %10 = tpu.matmul %9, %2, %cst {dimension_numbers = #tpu.dot_dimension_numbers<[1], [0], [0], [1], [0, 0, 1, 1], [], []>} : vector<24x24xf32>, vector<24x64xf32>, vector<24x64xf32> -> vector<24x64xf32>
    %11 = vector.broadcast %5 : vector<1x64xf32> to vector<24x64xf32>
    %12 = arith.addf %10, %11 : vector<24x64xf32>
    %cst_6 = arith.constant 0.000000e+00 : f32
    %13 = vector.broadcast %cst_6 : f32 to vector<24x64xf32>
    %14 = arith.maximumf %12, %13 : vector<24x64xf32>
    %15 = vector.extract_strided_slice %14 {offsets = [0, 0], sizes = [16, 32], strides = [1, 1]} : vector<24x64xf32> to vector<16x32xf32>
    %cst_7 = arith.constant dense<0.000000e+00> : vector<24x128xf32>
    %16 = tpu.matmul %14, %3, %cst_7 {dimension_numbers = #tpu.dot_dimension_numbers<[1], [0], [0], [1], [0, 0, 1, 1], [], []>} : vector<24x64xf32>, vector<64x128xf32>, vector<24x128xf32> -> vector<24x128xf32>
    %17 = vector.extract_strided_slice %16 {offsets = [0, 0], sizes = [16, 32], strides = [1, 1]} : vector<24x128xf32> to vector<16x32xf32>
    %18 = vector.extract_strided_slice %16 {offsets = [0, 32], sizes = [16, 32], strides = [1, 1]} : vector<24x128xf32> to vector<16x32xf32>
    %19 = vector.extract_strided_slice %16 {offsets = [0, 64], sizes = [16, 32], strides = [1, 1]} : vector<24x128xf32> to vector<16x32xf32>
    %20 = vector.extract_strided_slice %16 {offsets = [16, 96], sizes = [8, 32], strides = [1, 1]} : vector<24x128xf32> to vector<8x32xf32>
    %c0_8 = arith.constant 0 : index
    %c0_9 = arith.constant 0 : index
    %c0_10 = arith.constant 0 : index
    %21 = vector.load %arg2[%c0_8, %c0_9, %c0_10] : memref<1x16x40xf32, #tpu.memory_space<vmem>>, vector<1x16x40xf32>
    %22 = vector.shape_cast %21 : vector<1x16x40xf32> to vector<16x40xf32>
    %23 = tpu.iota {dimensions = array<i32: 1>} : vector<16x40xi32>
    %c16_i32 = arith.constant 16 : i32
    %24 = vector.broadcast %c16_i32 : i32 to vector<16x40xi32>
    %25 = arith.cmpi slt, %23, %24 : vector<16x40xi32>
    %c16_i32_11 = arith.constant 16 : i32
    %26 = vector.broadcast %c16_i32_11 : i32 to vector<16x40xi32>
    %27 = arith.cmpi sge, %23, %26 : vector<16x40xi32>
    %c32_i32 = arith.constant 32 : i32
    %28 = vector.broadcast %c32_i32 : i32 to vector<16x40xi32>
    %29 = arith.cmpi slt, %23, %28 : vector<16x40xi32>
    %30 = arith.andi %27, %29 : vector<16x40xi1>
    %cst_12 = arith.constant 0.000000e+00 : f32
    %31 = vector.broadcast %cst_12 : f32 to vector<16x40xf32>
    %32 = arith.select %25, %22, %31 : vector<16x40xi1>, vector<16x40xf32>
    %cst_13 = arith.constant dense<0.000000e+00> : vector<16xf32>
    %33 = vector.multi_reduction <add>, %32, %cst_13 [1] : vector<16x40xf32> to vector<16xf32>
    %34 = vector.shape_cast %33 : vector<16xf32> to vector<16x1xf32>
    %cst_14 = arith.constant 0.000000e+00 : f32
    %35 = vector.broadcast %cst_14 : f32 to vector<16x40xf32>
    %36 = arith.select %30, %22, %35 : vector<16x40xi1>, vector<16x40xf32>
    %cst_15 = arith.constant dense<0.000000e+00> : vector<16xf32>
    %37 = vector.multi_reduction <add>, %36, %cst_15 [1] : vector<16x40xf32> to vector<16xf32>
    %38 = vector.shape_cast %37 : vector<16xf32> to vector<16x1xf32>
    %cst_16 = arith.constant dense<0.000000e+00> : vector<16xf32>
    %39 = vector.multi_reduction <add>, %22, %cst_16 [1] : vector<16x40xf32> to vector<16xf32>
    %40 = vector.shape_cast %39 : vector<16xf32> to vector<16x1xf32>
    %41 = arith.subf %40, %34 : vector<16x1xf32>
    %42 = arith.subf %41, %38 : vector<16x1xf32>
    %cst_17 = arith.constant 1.000000e+00 : f32
    %43 = vector.broadcast %cst_17 : f32 to vector<16x1xf32>
    %44 = arith.maximumf %34, %43 : vector<16x1xf32>
    %45 = tpu.reciprocal %44 : vector<16x1xf32> -> vector<16x1xf32>
    %cst_18 = arith.constant 1.000000e+00 : f32
    %46 = vector.broadcast %cst_18 : f32 to vector<16x1xf32>
    %47 = arith.maximumf %38, %46 : vector<16x1xf32>
    %48 = tpu.reciprocal %47 : vector<16x1xf32> -> vector<16x1xf32>
    %cst_19 = arith.constant 1.000000e+00 : f32
    %49 = vector.broadcast %cst_19 : f32 to vector<16x1xf32>
    %50 = arith.maximumf %42, %49 : vector<16x1xf32>
    %51 = tpu.reciprocal %50 : vector<16x1xf32> -> vector<16x1xf32>
    %52 = vector.shape_cast %48 : vector<16x1xf32> to vector<16x1xf32>
    %53 = vector.broadcast %52 : vector<16x1xf32> to vector<16x40xf32>
    %54 = vector.shape_cast %51 : vector<16x1xf32> to vector<16x1xf32>
    %55 = vector.broadcast %54 : vector<16x1xf32> to vector<16x40xf32>
    %56 = arith.select %30, %53, %55 : vector<16x40xi1>, vector<16x40xf32>
    %57 = vector.shape_cast %45 : vector<16x1xf32> to vector<16x1xf32>
    %58 = vector.broadcast %57 : vector<16x1xf32> to vector<16x40xf32>
    %59 = arith.select %25, %58, %56 : vector<16x40xi1>, vector<16x40xf32>
    %60 = arith.mulf %22, %59 : vector<16x40xf32>
    %61 = tpu.concatenate %18, %19, %20 in 0 : vector<16x32xf32>, vector<16x32xf32>, vector<8x32xf32> -> vector<40x32xf32>
    %cst_20 = arith.constant dense<0.000000e+00> : vector<16x32xf32>
    %62 = tpu.matmul %60, %61, %cst_20 {dimension_numbers = #tpu.dot_dimension_numbers<[1], [0], [0], [1], [0, 0, 1, 1], [], []>} : vector<16x40xf32>, vector<40x32xf32>, vector<16x32xf32> -> vector<16x32xf32>
    %63 = arith.addf %17, %62 : vector<16x32xf32>
    %64 = vector.broadcast %6 : vector<1x32xf32> to vector<16x32xf32>
    %65 = arith.addf %63, %64 : vector<16x32xf32>
    %66 = arith.addf %65, %15 : vector<16x32xf32>
    %cst_21 = arith.constant 0.000000e+00 : f32
    %67 = vector.broadcast %cst_21 : f32 to vector<16x32xf32>
    %68 = arith.maximumf %66, %67 : vector<16x32xf32>
    %cst_22 = arith.constant dense<0.000000e+00> : vector<16x32xf32>
    %69 = tpu.matmul %68, %4, %cst_22 {dimension_numbers = #tpu.dot_dimension_numbers<[1], [0], [0], [1], [0, 0, 1, 1], [], []>} : vector<16x32xf32>, vector<32x32xf32>, vector<16x32xf32> -> vector<16x32xf32>
    %70 = vector.broadcast %7 : vector<1x32xf32> to vector<16x32xf32>
    %71 = arith.addf %69, %70 : vector<16x32xf32>
    %c0_23 = arith.constant 0 : index
    %c0_24 = arith.constant 0 : index
    %c0_25 = arith.constant 0 : index
    %72 = vector.load %arg5[%c0_23, %c0_24, %c0_25] : memref<1x16x32xf32, #tpu.memory_space<vmem>>, vector<1x16x32xf32>
    %73 = vector.shape_cast %72 : vector<1x16x32xf32> to vector<16x32xf32>
    %74 = vector.shape_cast %71 : vector<16x32xf32> to vector<1x16x32xf32>
    tpu.vector_store %arg5[%c0_23, %c0_24, %c0_25], %74 {strides = array<i32>} : memref<1x16x32xf32, #tpu.memory_space<vmem>>, vector<1x16x32xf32>,
    return
  }
  func.func @transform_0(%arg0: i32) -> (i32, i32, i32) {
    %c0_i32 = arith.constant 0 : i32
    %c0_i32_0 = arith.constant 0 : i32
    %c0_i32_1 = arith.constant 0 : i32
    return %arg0, %c0_i32, %c0_i32_0 : i32, i32, i32
  }
  func.func @transform_1(%arg0: i32) -> (i32, i32, i32) {
    %c0_i32 = arith.constant 0 : i32
    %c0_i32_0 = arith.constant 0 : i32
    %c0_i32_1 = arith.constant 0 : i32
    return %arg0, %c0_i32, %c0_i32_0 : i32, i32, i32
  }
  func.func @transform_2(%arg0: i32) -> (i32, i32) {
    %c0_i32 = arith.constant 0 : i32
    %c0_i32_0 = arith.constant 0 : i32
    %c0_i32_1 = arith.constant 0 : i32
    return %c0_i32, %c0_i32_0 : i32, i32
  }
  func.func @transform_3(%arg0: i32) -> (i32, i32) {
    %c0_i32 = arith.constant 0 : i32
    %c0_i32_0 = arith.constant 0 : i32
    %c0_i32_1 = arith.constant 0 : i32
    return %c0_i32, %c0_i32_0 : i32, i32
  }
  func.func @transform_4(%arg0: i32) -> (i32, i32, i32) {
    %c0_i32 = arith.constant 0 : i32
    %c0_i32_0 = arith.constant 0 : i32
    %c0_i32_1 = arith.constant 0 : i32
    return %arg0, %c0_i32, %c0_i32_0 : i32, i32, i32
  }
}

</mosaic_0001>

<llo_original>
// kernel: hetero_forecast_sage_forward.1
$region0: #{hetero_forecast_sage_forward.1}
  #allocation0 [shape = 'u32[]', space=smem, size = 0x4, offset = 0x4, fixed_abs, tag = 'smem constant byte address 0x4 - core index']
  #allocation1 [shape = 'u32[144,128]{1,0:T(1,128)}', space=vmem, size = 0x12000, scoped, tag = 'internal scratch']
  %s0 = inlined_call_operand.vmem [shape: f32[4,24,24], index: 0, kind: input, shape index: {}]
  %s1 = inlined_call_operand.vmem [shape: f32[4,16,40], index: 1, kind: input, shape index: {}]
  %s2 = inlined_call_operand.vmem [shape: f32[120,128], index: 2, kind: input, shape index: {}]
  %s3 = inlined_call_operand.vmem [shape: f32[1,128], index: 3, kind: input, shape index: {}]
  %s4 = inlined_call_operand.hbm [shape: f32[4,16,32], index: 4, kind: output, shape index: {}]
  %s5 = sld [smem:[#allocation0]]
  $region49: #{hetero_forecast_sage_forward.1} parent=0
    _
  %s7 = ssub.s32 1, %s5
  %s8 = scalar_select 0, %s7, %s5
  $region1: #{hetero_forecast_sage_forward.1} parent=0
    #allocation2 [shape = 'u8[16384]{0}', space=vmem, size = 0x4000, scoped, tag = 'output window, operand 0']
    #allocation3 [shape = 's32[2]{0}', space=sflag, size = 0x8, scoped, tag = 'scoped memory for hetero_forecast_sage_forward.1']
    %9 = vsyncpa [#allocation3], 0
    %s10 = scalar_lea.sflag [#allocation3], 1
    %11 = vsyncpa %s10, 0
    loop: start=0, step=1, limit=6
    $region2: #{hetero_forecast_sage_forward.1} parent=1 // loop_pre_header
      _
    $region3: #{hetero_forecast_sage_forward.1} parent=1 // loop_header
      %s13 = sphi 0, %s17
      %p14 = scmp.ge.s32.totalorder %s13, 6
      %s23 = sphi 0, %s25
      %s26 = sphi 0, %s23
      %s27 = sphi 0, %s26
      %s43 = sphi 0, %s27
      %s49 = sphi 0, %s51
      %s52 = sphi 0, %s49
      %s53 = sphi 0, %s52
      %s69 = sphi 0, %s53
      %s73 = sphi 0, %s73
      %s75 = sphi 0, %s73
      %s76 = sphi 0, %s75
      %s90 = sphi 0, %s76
      %s94 = sphi 0, %s94
      %s96 = sphi 0, %s94
      %s97 = sphi 0, %s96
      %s111 = sphi 0, %s97
      %s117 = sphi 0, %s119
      %s120 = sphi 0, %s117
      %s121 = sphi 0, %s120
      %s137 = sphi 0, %s121
    $region4: #{hetero_forecast_sage_forward.1} parent=1 // loop_header_branch
      %16 = sbr.rel (%p14) target = $region8
    $region5: #{hetero_forecast_sage_forward.1} parent=1 // loop_body
      %s18 = ssub.s32 %s13, 1
      %s19 = ssub.s32 %s13, 2
      %s20 = sadd.s32 %s13, 1
      %s21 = ssub.s32 %s13, %s20
      %p22 = scmp.eq.s32.totalorder %s21, 0
      %s24 = sadd.s32 %s23, 1
      %s25 = scalar_select %p22, %s23, %s24
      %p28 = pneg %p22
      %p29 = scmp.eq.s32.totalorder %s13, 3
      %p30 = por %p28, %p29
      %p31 = scmp.ne.s32.totalorder %s23, %s26
      %p32 = scmp.eq.s32.totalorder %s13, 0
      %p33 = por %p31, %p32
      %p34 = scmp.ne.s32.totalorder %s23, %s26
      %p35 = scmp.eq.s32.totalorder %s18, 3
      %p36 = por %p34, %p35
      %p37 = scmp.ne.s32.totalorder %s26, %s27
      %p38 = scmp.eq.s32.totalorder %s18, 0
      %p39 = por %p37, %p38
      %p40 = scmp.ne.s32.totalorder %s26, %s27
      %p41 = scmp.eq.s32.totalorder %s19, 3
      %p42 = por %p40, %p41
      %p44 = scmp.ne.s32.totalorder %s27, %s43
      %p45 = scmp.eq.s32.totalorder %s19, 0
      %p46 = por %p44, %p45
      %s47 = ssub.s32 %s13, %s20
      %p48 = scmp.eq.s32.totalorder %s47, 0
      %s50 = sadd.s32 %s49, 1
      %s51 = scalar_select %p48, %s49, %s50
      %p54 = pneg %p48
      %p55 = scmp.eq.s32.totalorder %s13, 3
      %p56 = por %p54, %p55
      %p57 = scmp.ne.s32.totalorder %s49, %s52
      %p58 = scmp.eq.s32.totalorder %s13, 0
      %p59 = por %p57, %p58
      %p60 = scmp.ne.s32.totalorder %s49, %s52
      %p61 = scmp.eq.s32.totalorder %s18, 3
      %p62 = por %p60, %p61
      %p63 = scmp.ne.s32.totalorder %s52, %s53
      %p64 = scmp.eq.s32.totalorder %s18, 0
      %p65 = por %p63, %p64
      %p66 = scmp.ne.s32.totalorder %s52, %s53
      %p67 = scmp.eq.s32.totalorder %s19, 3
      %p68 = por %p66, %p67
      %p70 = scmp.ne.s32.totalorder %s53, %s69
      %p71 = scmp.eq.s32.totalorder %s19, 0
      %p72 = por %p70, %p71
      %s74 = sadd.s32 %s73, 1
      %p77 = scmp.eq.s32.totalorder %s13, 3
      %p78 = scmp.ne.s32.totalorder %s73, %s75
      %p79 = scmp.eq.s32.totalorder %s13, 0
      %p80 = por %p78, %p79
      %p81 = scmp.ne.s32.totalorder %s73, %s75
      %p82 = scmp.eq.s32.totalorder %s18, 3
      %p83 = por %p81, %p82
      %p84 = scmp.ne.s32.totalorder %s75, %s76
      %p85 = scmp.eq.s32.totalorder %s18, 0
      %p86 = por %p84, %p85
      %p87 = scmp.ne.s32.totalorder %s75, %s76
      %p88 = scmp.eq.s32.totalorder %s19, 3
      %p89 = por %p87, %p88
      %p91 = scmp.ne.s32.totalorder %s76, %s90
      %p92 = scmp.eq.s32.totalorder %s19, 0
      %p93 = por %p91, %p92
      %s95 = sadd.s32 %s94, 1
      %p98 = scmp.eq.s32.totalorder %s13, 3
      %p99 = scmp.ne.s32.totalorder %s94, %s96
      %p100 = scmp.eq.s32.totalorder %s13, 0
      %p101 = por %p99, %p100
      %p102 = scmp.ne.s32.totalorder %s94, %s96
      %p103 = scmp.eq.s32.totalorder %s18, 3
      %p104 = por %p102, %p103
      %p105 = scmp.ne.s32.totalorder %s96, %s97
      %p106 = scmp.eq.s32.totalorder %s18, 0
      %p107 = por %p105, %p106
      %p108 = scmp.ne.s32.totalorder %s96, %s97
      %p109 = scmp.eq.s32.totalorder %s19, 3
      %p110 = por %p108, %p109
      %p112 = scmp.ne.s32.totalorder %s97, %s111
      %p113 = scmp.eq.s32.totalorder %s19, 0
      %p114 = por %p112, %p113
      %s115 = ssub.s32 %s13, %s20
      %p116 = scmp.eq.s32.totalorder %s115, 0
      %s118 = sadd.s32 %s117, 1
      %s119 = scalar_select %p116, %s117, %s118
      %p122 = pneg %p116
      %p123 = scmp.eq.s32.totalorder %s13, 3
      %p124 = por %p122, %p123
      %p125 = scmp.ne.s32.totalorder %s117, %s120
      %p126 = scmp.eq.s32.totalorder %s13, 0
      %p127 = por %p125, %p126
      %p128 = scmp.ne.s32.totalorder %s117, %s120
      %p129 = scmp.eq.s32.totalorder %s18, 3
      %p130 = por %p128, %p129
      %p131 = scmp.ne.s32.totalorder %s120, %s121
      %p132 = scmp.eq.s32.totalorder %s18, 0
      %p133 = por %p131, %p132
      %p134 = scmp.ne.s32.totalorder %s120, %s121
      %p135 = scmp.eq.s32.totalorder %s19, 3
      %p136 = por %p134, %p135
      %p138 = scmp.ne.s32.totalorder %s121, %s137
      %p139 = scmp.eq.s32.totalorder %s19, 0
      %p140 = por %p138, %p139
      %p141 = scmp.le.s32.totalorder 1, %s13
      %p142 = scmp.lt.s32.totalorder %s13, 5
      %p143 = pnand %p141, %p142
      %p144 = pneg %p143
      // Predicated region
      $region9: #{hetero_forecast_sage_forward.1} parent=5 // pred_check
        _
      $region10: #{hetero_forecast_sage_forward.1} parent=5 // pred_check_branch
        %146 = sbr.rel (%p143) target = $region12
      $region11: #{hetero_forecast_sage_forward.1} parent=5 // pred_region
        %s147 = ssub.s32 %s13, 1
        // Predicated region
        $region13: #{hetero_forecast_sage_forward.1} parent=11 // pred_check
          %p148 = pneg %p86
        $region14: #{hetero_forecast_sage_forward.1} parent=11 // pred_check_branch
          %150 = sbr.rel (%p148) target = $region16
        $region15: #{hetero_forecast_sage_forward.1} parent=11 // pred_region
          _
        $region16: #{hetero_forecast_sage_forward.1} parent=11 // pred_fallthru
          _
        // Predicated region
        $region17: #{hetero_forecast_sage_forward.1} parent=11 // pred_check
          %p151 = pneg %p107
        $region18: #{hetero_forecast_sage_forward.1} parent=11 // pred_check_branch
          %153 = sbr.rel (%p151) target = $region20
        $region19: #{hetero_forecast_sage_forward.1} parent=11 // pred_region
          _
        $region20: #{hetero_forecast_sage_forward.1} parent=11 // pred_fallthru
          _
      $region12: #{hetero_forecast_sage_forward.1} parent=5 // pred_fallthru
        _
      %p154 = scmp.lt.s32.totalorder %s13, 4
      // Predicated region
      $region21: #{hetero_forecast_sage_forward.1} parent=5 // pred_check
        %p155 = pneg %p154
      $region22: #{hetero_forecast_sage_forward.1} parent=5 // pred_check_branch
        %157 = sbr.rel (%p155) target = $region24
      $region23: #{hetero_forecast_sage_forward.1} parent=5 // pred_region
        // Predicated region
        $region25: #{hetero_forecast_sage_forward.1} parent=23 // pred_check
          %p158 = pneg %p33
        $region26: #{hetero_forecast_sage_forward.1} parent=23 // pred_check_branch
          %160 = sbr.rel (%p158) target = $region28
        $region27: #{hetero_forecast_sage_forward.1} parent=23 // pred_region
          %p161 = scmp.lt.s32.totalorder %s13, 3
          %s162 = scalar_select %p161, %s13, 3
          %s163 = smul.addr %s162, 3
          %s164 = smul.addr %s163, 8
          %s165 = scalar_lea.vmem %s0, %s164
        $region28: #{hetero_forecast_sage_forward.1} parent=23 // pred_fallthru
          _
        // Predicated region
        $region29: #{hetero_forecast_sage_forward.1} parent=23 // pred_check
          %p166 = pneg %p59
        $region30: #{hetero_forecast_sage_forward.1} parent=23 // pred_check_branch
          %168 = sbr.rel (%p166) target = $region32
        $region31: #{hetero_forecast_sage_forward.1} parent=23 // pred_region
          %p169 = scmp.lt.s32.totalorder %s13, 3
          %s170 = scalar_select %p169, %s13, 3
          %s171 = smul.addr %s170, 2
          %s172 = smul.addr %s171, 8
          %s173 = scalar_lea.vmem %s1, %s172
        $region32: #{hetero_forecast_sage_forward.1} parent=23 // pred_fallthru
          _
      $region24: #{hetero_forecast_sage_forward.1} parent=5 // pred_fallthru
        _
      %p174 = scmp.le.s32.totalorder 1, %s13
      %p175 = scmp.lt.s32.totalorder %s13, 5
      %p176 = pnand %p174, %p175
      %p177 = pneg %p176
      // Predicated region
      $region33: #{hetero_forecast_sage_forward.1} parent=5 // pred_check
        _
      $region34: #{hetero_forecast_sage_forward.1} parent=5 // pred_check_branch
        %179 = sbr.rel (%p176) target = $region36
      $region35: #{hetero_forecast_sage_forward.1} parent=5 // pred_region
        %s180 = ssub.s32 %s13, 1
        %p181 = scmp.lt.s32.totalorder %s18, 3
        %s182 = scalar_select %p181, %s18, 3
        %s183 = smul.addr %s182, 3
        %s184 = smul.addr %s183, 8
        %s185 = scalar_lea.vmem %s0, %s184
        %p186 = pneg %p39
        %p187 = pneg %p36
        %p188 = scmp.lt.s32.totalorder %s18, 3
        %s189 = scalar_select %p188, %s18, 3
        %s190 = smul.addr %s189, 2
        %s191 = smul.addr %s190, 8
        %s192 = scalar_lea.vmem %s1, %s191
        %p193 = pneg %p65
        %p194 = pneg %p62
        %p195 = pneg %p86
        %p196 = pneg %p83
        %p197 = pneg %p107
        %p198 = pneg %p104
        %p199 = pneg %p133
        %p200 = pneg %p130
        %s201 = sand.u32 %s120, 1
        %s202 = scalar_lea.sflag [#allocation3], %s201
        %s203 = sand.u32 %s120, 1
        %s204 = smul.addr %s203, 16
        %s205 = scalar_lea.vmem [#allocation2], %s204
        %p206 = scmp.lt.s32.totalorder %s18, 3
        %s207 = scalar_select %p206, %s18, 3
        %s208 = smul.addr %s207, 3
        %s209 = smul.addr %s208, 8
        %s210 = scalar_lea.vmem %s0, %s209
        %p211 = scmp.lt.s32.totalorder %s18, 3
        %s212 = scalar_select %p211, %s18, 3
        %s213 = smul.addr %s212, 2
        %s214 = smul.addr %s213, 8
        %s215 = scalar_lea.vmem %s1, %s214
        %v216 = vld [vmem:[%s2] sm:$0xff]
        %v217 = vld [vmem:[%s2 + $0x8] sm:$0xff]
        %v218 = vld [vmem:[%s2 + $0x10] sm:$0xff]
        %v219 = vld [vmem:[%s2 + $0x18] sm:$0xff]
        %v220 = vld [vmem:[%s2 + $0x20] sm:$0xff]
        %v221 = vld [vmem:[%s2 + $0x28] sm:$0xff]
        %v222 = vld [vmem:[%s2 + $0x30] sm:$0xff]
        %v223 = vld [vmem:[%s2 + $0x38] sm:$0xff]
        %v224 = vld [vmem:[%s2 + $0x40] sm:$0xff]
        %v225 = vld [vmem:[%s2 + $0x48] sm:$0xff]
        %v226 = vld [vmem:[%s2 + $0x50] sm:$0xff]
        %v227 = vld [vmem:[%s2 + $0x58] sm:$0xff]
        %v228 = vld [vmem:[%s2 + $0x60] sm:$0xff]
        %v229 = vld [vmem:[%s2 + $0x68] sm:$0xff]
        %v230 = vld [vmem:[%s2 + $0x70] sm:$0xff]
        %v231 = vld [vmem:[%s3] sm:$0x1]
        %v232 = vld [vmem:[%s210] sm:$0xff]
        %v233 = vld [vmem:[%s210 + $0x8] sm:$0xff]
        %v234 = vld [vmem:[%s210 + $0x10] sm:$0xff]
        %v236 = vlaneseq
        %v237 = vshrl.u32 %v236, 7
        %v238 = vsub.s32 0, %v237
        %v239 = vrot.slane %v231, %v238
        %vm241 = vcmask 195584
        %v243 = vsel %vm241, %v232, 0
        %v246 = vsel %vm241, %v233, 0
        %v249 = vsel %vm241, %v234, 0
        %251 = vmatprep.subr.mxu0 0.0
        %252 = vmatpush1.msra.mxu0 0.0
        %253 = vmatprep.subr.mxu0 0.0
        %254 = vmatpush1.msra.mxu0 0.0
        %255 = vmatprep.subr.mxu0 0.0
        %256 = vmatpush1.msra.mxu0 0.0
        %257 = vmatprep.subr.mxu0 0.0
        %258 = vmatpush1.msra.mxu0 0.0
        %259 = vmatprep.subr.mxu0 0.0
        %260 = vmatpush1.msra.mxu0 0.0
        %261 = vmatprep.subr.mxu0 0.0
        %262 = vmatpush1.msra.mxu0 0.0
        %263 = vmatprep.subr.mxu0 0.0
        %264 = vmatpush1.msra.mxu0 0.0
        %265 = vmatprep.subr.mxu0 0.0
        %266 = vmatpush1.msra.mxu0 0.0
        %267 = vmatprep.subr.mxu0 0.0
        %268 = vmatpush1.msra.mxu0 0.0
        %269 = vmatprep.subr.mxu0 0.0
        %270 = vmatpush1.msra.mxu0 0.0
        %271 = vmatprep.subr.mxu0 0.0
        %272 = vmatpush1.msra.mxu0 0.0
        %273 = vmatprep.subr.mxu0 0.0
        %274 = vmatpush1.msra.mxu0 0.0
        %275 = vmatprep.subr.mxu0 0.0
        %276 = vmatpush1.msra.mxu0 0.0
        %277 = vmatprep.subr.mxu0 0.0
        %278 = vmatpush1.msra.mxu0 %v218
        %279 = vmatprep.subr.mxu0 0.0
        %280 = vmatpush1.msra.mxu0 %v217
        %281 = vmatprep.subr.mxu0 0.0
        %282 = vmatpush1.msra.mxu0 %v216
        %283 = vmatprep.subr.mxu0 0.0
        %284 = vmatpush2.msra.mxu0 0.0
        %285 = vmatprep.subr.mxu0 0.0
        %286 = vmatpush2.msra.mxu0 0.0
        %287 = vmatprep.subr.mxu0 0.0
        %288 = vmatpush2.msra.mxu0 0.0
        %289 = vmatprep.subr.mxu0 0.0
        %290 = vmatpush2.msra.mxu0 0.0
        %291 = vmatprep.subr.mxu0 0.0
        %292 = vmatpush2.msra.mxu0 0.0
        %293 = vmatprep.subr.mxu0 0.0
        %294 = vmatpush2.msra.mxu0 0.0
        %295 = vmatprep.subr.mxu0 0.0
        %296 = vmatpush2.msra.mxu0 0.0
        %297 = vmatprep.subr.mxu0 0.0
        %298 = vmatpush2.msra.mxu0 0.0
        %299 = vmatprep.subr.mxu0 0.0
        %300 = vmatpush2.msra.mxu0 0.0
        %301 = vmatprep.subr.mxu0 0.0
        %302 = vmatpush2.msra.mxu0 0.0
        %303 = vmatprep.subr.mxu0 0.0
        %304 = vmatpush2.msra.mxu0 0.0
        %305 = vmatprep.subr.mxu0 0.0
        %306 = vmatpush2.msra.mxu0 0.0
        %307 = vmatprep.subr.mxu0 0.0
        %308 = vmatpush2.msra.mxu0 0.0
        %309 = vmatprep.subr.mxu0 0.0
        %310 = vmatpush2.msra.mxu0 0.0
        %311 = vmatprep.subr.mxu0 0.0
        %312 = vmatpush2.msra.mxu0 0.0
        %313 = vmatprep.subr.mxu0 0.0
        %314 = vmatpush2.msra.mxu0 0.0
        %315 = vmatprep.mubr.f32.mxu0 0.0
        %316 = vmatmul.mubr.f32.gmra.mxu0 %v243
        %v317 = vpop.f32.mrf.mxu0
        %v318 = vadd.f32 %v239, %v317
        %v319 = vpop.f32.mrf.mxu0
        %320 = vmatprep.mubr.f32.mxu0 0.0
        %321 = vmatmul.mubr.f32.gmra.mxu0 %v246
        %v322 = vpop.f32.mrf.mxu0
        %v323 = vadd.f32 %v239, %v322
        %v324 = vpop.f32.mrf.mxu0
        %325 = vmatprep.mubr.f32.mxu0 0.0
        %326 = vmatmul.mubr.f32.gmra.mxu0 %v249
        %v327 = vpop.f32.mrf.mxu0
        %v328 = vadd.f32 %v239, %v327
        %v329 = vpop.f32.mrf.mxu0
        %330 = vdwg.mxu0
        %v331 = vmax.f32 %v318, 0.0
        %v332 = vmax.f32 %v323, 0.0
        %v333 = vmax.f32 %v328, 0.0
        %vm334 = vcmask 523264
        %v336 = vsel %vm334, %v331, 0
        %v339 = vsel %vm334, %v332, 0
        %v342 = vsel %vm334, %v333, 0
        %344 = vmatprep.subr.mxu0 0.0
        %345 = vmatpush1.msra.mxu0 0.0
        %346 = vmatprep.subr.mxu0 0.0
        %347 = vmatpush1.msra.mxu0 0.0
        %348 = vmatprep.subr.mxu0 0.0
        %349 = vmatpush1.msra.mxu0 0.0
        %350 = vmatprep.subr.mxu0 0.0
        %351 = vmatpush1.msra.mxu0 0.0
        %352 = vmatprep.subr.mxu0 0.0
        %353 = vmatpush1.msra.mxu0 0.0
        %354 = vmatprep.subr.mxu0 0.0
        %355 = vmatpush1.msra.mxu0 0.0
        %356 = vmatprep.subr.mxu0 0.0
        %357 = vmatpush1.msra.mxu0 0.0
        %358 = vmatprep.subr.mxu0 0.0
        %359 = vmatpush1.msra.mxu0 0.0
        %360 = vmatprep.subr.mxu0 0.0
        %361 = vmatpush1.msra.mxu0 %v226
        %362 = vmatprep.subr.mxu0 0.0
        %363 = vmatpush1.msra.mxu0 %v225
        %364 = vmatprep.subr.mxu0 0.0
        %365 = vmatpush1.msra.mxu0 %v224
        %366 = vmatprep.subr.mxu0 0.0
        %367 = vmatpush1.msra.mxu0 %v223
        %368 = vmatprep.subr.mxu0 0.0
        %369 = vmatpush1.msra.mxu0 %v222
        %370 = vmatprep.subr.mxu0 0.0
        %371 = vmatpush1.msra.mxu0 %v221
        %372 = vmatprep.subr.mxu0 0.0
        %373 = vmatpush1.msra.mxu0 %v220
        %374 = vmatprep.subr.mxu0 0.0
        %375 = vmatpush1.msra.mxu0 %v219
        %376 = vmatprep.subr.mxu0 0.0
        %377 = vmatpush2.msra.mxu0 0.0
        %378 = vmatprep.subr.mxu0 0.0
        %379 = vmatpush2.msra.mxu0 0.0
        %380 = vmatprep.subr.mxu0 0.0
        %381 = vmatpush2.msra.mxu0 0.0
        %382 = vmatprep.subr.mxu0 0.0
        %383 = vmatpush2.msra.mxu0 0.0
        %384 = vmatprep.subr.mxu0 0.0
        %385 = vmatpush2.msra.mxu0 0.0
        %386 = vmatprep.subr.mxu0 0.0
        %387 = vmatpush2.msra.mxu0 0.0
        %388 = vmatprep.subr.mxu0 0.0
        %389 = vmatpush2.msra.mxu0 0.0
        %390 = vmatprep.subr.mxu0 0.0
        %391 = vmatpush2.msra.mxu0 0.0
        %392 = vmatprep.subr.mxu0 0.0
        %393 = vmatpush2.msra.mxu0 0.0
        %394 = vmatprep.subr.mxu0 0.0
        %395 = vmatpush2.msra.mxu0 0.0
        %396 = vmatprep.subr.mxu0 0.0
        %397 = vmatpush2.msra.mxu0 0.0
        %398 = vmatprep.subr.mxu0 0.0
        %399 = vmatpush2.msra.mxu0 0.0
        %400 = vmatprep.subr.mxu0 0.0
        %401 = vmatpush2.msra.mxu0 0.0
        %402 = vmatprep.subr.mxu0 0.0
        %403 = vmatpush2.msra.mxu0 0.0
        %404 = vmatprep.subr.mxu0 0.0
        %405 = vmatpush2.msra.mxu0 0.0
        %406 = vmatprep.subr.mxu0 0.0
        %407 = vmatpush2.msra.mxu0 0.0
        %408 = vmatprep.mubr.f32.mxu0 0.0
        %409 = vmatmul.mubr.f32.gmra.mxu0 %v336
        %v410 = vpop.f32.mrf.mxu0
        %v411 = vadd.f32 0.0, %v410
        %v412 = vpop.f32.mrf.mxu0
        %413 = vmatprep.mubr.f32.mxu0 0.0
        %414 = vmatmul.mubr.f32.gmra.mxu0 %v339
        %v415 = vpop.f32.mrf.mxu0
        %v416 = vadd.f32 0.0, %v415
        %v417 = vpop.f32.mrf.mxu0
        %418 = vmatprep.mubr.f32.mxu0 0.0
        %419 = vmatmul.mubr.f32.gmra.mxu0 %v342
        %v420 = vpop.f32.mrf.mxu0
        %v421 = vadd.f32 0.0, %v420
        %v422 = vpop.f32.mrf.mxu0
        %423 = vdwg.mxu0
        %v424 = vld [vmem:[%s215] sm:$0xff]
        %v425 = vld [vmem:[%s215 + $0x8] sm:$0xff]
        %v426 = vlaneseq
        %v427 = vand.u32 %v426, 127
        %vm428 = vcmp.lt.s32.totalorder %v427, 16
        %vm429 = vcmp.ge.s32.totalorder %v427, 16
        %vm430 = vcmp.lt.s32.totalorder %v427, 32
        %vm431 = vmand %vm429, %vm430
        %v432 = vsel %vm428, %v424, 0.0
        %v433 = vsel %vm428, %v425, 0.0
        %vm434 = vcmask 326656
        %v435 = vsel %vm434, %v432, 0.0
        %436 = vadd.xlane.f32.xlu0 %v435
        %v437 = vpop.xlane.xlu0 %436
        %v438 = vsel %vm434, %v433, 0.0
        %439 = vadd.xlane.f32.xlu0 %v438
        %v440 = vpop.xlane.xlu0 %439
        %v441 = vsel %vm431, %v424, 0.0
        %v442 = vsel %vm431, %v425, 0.0
        %v443 = vsel %vm434, %v441, 0.0
        %444 = vadd.xlane.f32.xlu0 %v443
        %v445 = vpop.xlane.xlu0 %444
        %v446 = vsel %vm434, %v442, 0.0
        %447 = vadd.xlane.f32.xlu0 %v446
        %v448 = vpop.xlane.xlu0 %447
        %v449 = vsel %vm434, %v424, 0.0
        %450 = vadd.xlane.f32.xlu0 %v449
        %v451 = vpop.xlane.xlu0 %450
        %v452 = vsel %vm434, %v425, 0.0
        %453 = vadd.xlane.f32.xlu0 %v452
        %v454 = vpop.xlane.xlu0 %453
        %v455 = vsub.f32 %v451, %v437
        %v456 = vsub.f32 %v454, %v440
        %v457 = vsub.f32 %v455, %v445
        %v458 = vsub.f32 %v456, %v448
        %v459 = vmax.f32 %v437, 1.0
        %v460 = vmax.f32 %v440, 1.0
        %v461 = vrcp.pop %v459
        %v462 = vrcp.pop %v460
        %v463 = vmax.f32 %v445, 1.0
        %v464 = vmax.f32 %v448, 1.0
        %v465 = vrcp.pop %v463
        %v466 = vrcp.pop %v464
        %v467 = vmax.f32 %v457, 1.0
        %v468 = vmax.f32 %v458, 1.0
        %v469 = vrcp.pop %v467
        %v470 = vrcp.pop %v468
        %v471 = vsel %vm431, %v465, %v469
        %v472 = vsel %vm431, %v466, %v470
        %v473 = vsel %vm428, %v461, %v471
        %v474 = vsel %vm428, %v462, %v472
        %v475 = vmul.f32 %v424, %v473
        %v476 = vmul.f32 %v425, %v474
        %479 = vrot.lane.b32.xlu0 %v411, 96
        %v480 = vpop.permute.xlu0 %479
        %481 = vrot.lane.b32.xlu0 %v416, 96
        %v482 = vpop.permute.xlu0 %481
        %484 = vrot.lane.b32.xlu0 %v421, 64
        %v485 = vpop.permute.xlu0 %484
        %486 = vrot.lane.b32.xlu0 %v480, 96
        %v487 = vpop.permute.xlu0 %486
        %488 = vrot.lane.b32.xlu0 %v482, 96
        %v489 = vpop.permute.xlu0 %488
        %490 = vrot.lane.b32.xlu0 %v485, 96
        %v491 = vpop.permute.xlu0 %490
        %v498 = vsel %vm434, %v475, 0
        %v501 = vsel %vm434, %v476, 0
        %503 = vmatprep.subr.mxu0 0.0
        %504 = vmatpush1.msra.mxu0 0.0
        %505 = vmatprep.subr.mxu0 0.0
        %506 = vmatpush1.msra.mxu0 0.0
        %507 = vmatprep.subr.mxu0 0.0
        %508 = vmatpush1.msra.mxu0 0.0
        %509 = vmatprep.subr.mxu0 0.0
        %510 = vmatpush1.msra.mxu0 0.0
        %511 = vmatprep.subr.mxu0 0.0
        %512 = vmatpush1.msra.mxu0 0.0
        %513 = vmatprep.subr.mxu0 0.0
        %514 = vmatpush1.msra.mxu0 0.0
        %515 = vmatprep.subr.mxu0 0.0
        %516 = vmatpush1.msra.mxu0 0.0
        %517 = vmatprep.subr.mxu0 0.0
        %518 = vmatpush1.msra.mxu0 0.0
        %519 = vmatprep.subr.mxu0 0.0
        %520 = vmatpush1.msra.mxu0 0.0
        %521 = vmatprep.subr.mxu0 0.0
        %522 = vmatpush1.msra.mxu0 0.0
        %523 = vmatprep.subr.mxu0 0.0
        %524 = vmatpush1.msra.mxu0 0.0
        %525 = vmatprep.subr.mxu0 0.0
        %526 = vmatpush1.msra.mxu0 %v491
        %527 = vmatprep.subr.mxu0 0.0
        %528 = vmatpush1.msra.mxu0 %v489
        %529 = vmatprep.subr.mxu0 0.0
        %530 = vmatpush1.msra.mxu0 %v487
        %531 = vmatprep.subr.mxu0 0.0
        %532 = vmatpush1.msra.mxu0 %v482
        %533 = vmatprep.subr.mxu0 0.0
        %534 = vmatpush1.msra.mxu0 %v480
        %535 = vmatprep.subr.mxu0 0.0
        %536 = vmatpush2.msra.mxu0 0.0
        %537 = vmatprep.subr.mxu0 0.0
        %538 = vmatpush2.msra.mxu0 0.0
        %539 = vmatprep.subr.mxu0 0.0
        %540 = vmatpush2.msra.mxu0 0.0
        %541 = vmatprep.subr.mxu0 0.0
        %542 = vmatpush2.msra.mxu0 0.0
        %543 = vmatprep.subr.mxu0 0.0
        %544 = vmatpush2.msra.mxu0 0.0
        %545 = vmatprep.subr.mxu0 0.0
        %546 = vmatpush2.msra.mxu0 0.0
        %547 = vmatprep.subr.mxu0 0.0
        %548 = vmatpush2.msra.mxu0 0.0
        %549 = vmatprep.subr.mxu0 0.0
        %550 = vmatpush2.msra.mxu0 0.0
        %551 = vmatprep.subr.mxu0 0.0
        %552 = vmatpush2.msra.mxu0 0.0
        %553 = vmatprep.subr.mxu0 0.0
        %554 = vmatpush2.msra.mxu0 0.0
        %555 = vmatprep.subr.mxu0 0.0
        %556 = vmatpush2.msra.mxu0 0.0
        %557 = vmatprep.subr.mxu0 0.0
        %558 = vmatpush2.msra.mxu0 0.0
        %559 = vmatprep.subr.mxu0 0.0
        %560 = vmatpush2.msra.mxu0 0.0
        %561 = vmatprep.subr.mxu0 0.0
        %562 = vmatpush2.msra.mxu0 0.0
        %563 = vmatprep.subr.mxu0 0.0
        %564 = vmatpush2.msra.mxu0 0.0
        %565 = vmatprep.subr.mxu0 0.0
        %566 = vmatpush2.msra.mxu0 0.0
        %567 = vmatprep.mubr.f32.mxu0 0.0
        %568 = vmatmul.mubr.f32.gmra.mxu0 %v498
        %v569 = vpop.f32.mrf.mxu0
        %v570 = vadd.f32 0.0, %v569
        %v571 = vpop.f32.mrf.mxu0
        %572 = vmatprep.mubr.f32.mxu0 0.0
        %573 = vmatmul.mubr.f32.gmra.mxu0 %v501
        %v574 = vpop.f32.mrf.mxu0
        %v575 = vadd.f32 0.0, %v574
        %v576 = vpop.f32.mrf.mxu0
        %577 = vdwg.mxu0
        %v578 = vadd.f32 %v411, %v570
        %v579 = vadd.f32 %v416, %v575
        %580 = vrot.lane.b32.xlu0 %v239, 64
        %v581 = vpop.permute.xlu0 %580
        %v583 = vadd.f32 %v578, %v581
        %v584 = vadd.f32 %v579, %v581
        %v585 = vadd.f32 %v583, %v331
        %v586 = vadd.f32 %v584, %v332
        %v587 = vmax.f32 %v585, 0.0
        %v588 = vmax.f32 %v586, 0.0
        %589 = vrot.lane.b32.xlu0 %v239, 32
        %v590 = vpop.permute.xlu0 %589
        %vm592 = vcmask 261120
        %v594 = vsel %vm592, %v587, 0
        %v597 = vsel %vm592, %v588, 0
        %599 = vmatprep.subr.mxu0 0.0
        %600 = vmatpush1.msra.mxu0 0.0
        %601 = vmatprep.subr.mxu0 0.0
        %602 = vmatpush1.msra.mxu0 0.0
        %603 = vmatprep.subr.mxu0 0.0
        %604 = vmatpush1.msra.mxu0 0.0
        %605 = vmatprep.subr.mxu0 0.0
        %606 = vmatpush1.msra.mxu0 0.0
        %607 = vmatprep.subr.mxu0 0.0
        %608 = vmatpush1.msra.mxu0 0.0
        %609 = vmatprep.subr.mxu0 0.0
        %610 = vmatpush1.msra.mxu0 0.0
        %611 = vmatprep.subr.mxu0 0.0
        %612 = vmatpush1.msra.mxu0 0.0
        %613 = vmatprep.subr.mxu0 0.0
        %614 = vmatpush1.msra.mxu0 0.0
        %615 = vmatprep.subr.mxu0 0.0
        %616 = vmatpush1.msra.mxu0 0.0
        %617 = vmatprep.subr.mxu0 0.0
        %618 = vmatpush1.msra.mxu0 0.0
        %619 = vmatprep.subr.mxu0 0.0
        %620 = vmatpush1.msra.mxu0 0.0
        %621 = vmatprep.subr.mxu0 0.0
        %622 = vmatpush1.msra.mxu0 0.0
        %623 = vmatprep.subr.mxu0 0.0
        %624 = vmatpush1.msra.mxu0 %v230
        %625 = vmatprep.subr.mxu0 0.0
        %626 = vmatpush1.msra.mxu0 %v229
        %627 = vmatprep.subr.mxu0 0.0
        %628 = vmatpush1.msra.mxu0 %v228
        %629 = vmatprep.subr.mxu0 0.0
        %630 = vmatpush1.msra.mxu0 %v227
        %631 = vmatprep.subr.mxu0 0.0
        %632 = vmatpush2.msra.mxu0 0.0
        %633 = vmatprep.subr.mxu0 0.0
        %634 = vmatpush2.msra.mxu0 0.0
        %635 = vmatprep.subr.mxu0 0.0
        %636 = vmatpush2.msra.mxu0 0.0
        %637 = vmatprep.subr.mxu0 0.0
        %638 = vmatpush2.msra.mxu0 0.0
        %639 = vmatprep.subr.mxu0 0.0
        %640 = vmatpush2.msra.mxu0 0.0
        %641 = vmatprep.subr.mxu0 0.0
        %642 = vmatpush2.msra.mxu0 0.0
        %643 = vmatprep.subr.mxu0 0.0
        %644 = vmatpush2.msra.mxu0 0.0
        %645 = vmatprep.subr.mxu0 0.0
        %646 = vmatpush2.msra.mxu0 0.0
        %647 = vmatprep.subr.mxu0 0.0
        %648 = vmatpush2.msra.mxu0 0.0
        %649 = vmatprep.subr.mxu0 0.0
        %650 = vmatpush2.msra.mxu0 0.0
        %651 = vmatprep.subr.mxu0 0.0
        %652 = vmatpush2.msra.mxu0 0.0
        %653 = vmatprep.subr.mxu0 0.0
        %654 = vmatpush2.msra.mxu0 0.0
        %655 = vmatprep.subr.mxu0 0.0
        %656 = vmatpush2.msra.mxu0 0.0
        %657 = vmatprep.subr.mxu0 0.0
        %658 = vmatpush2.msra.mxu0 0.0
        %659 = vmatprep.subr.mxu0 0.0
        %660 = vmatpush2.msra.mxu0 0.0
        %661 = vmatprep.subr.mxu0 0.0
        %662 = vmatpush2.msra.mxu0 0.0
        %663 = vmatprep.mubr.f32.mxu0 0.0
        %664 = vmatmul.mubr.f32.gmra.mxu0 %v594
        %v665 = vpop.f32.mrf.mxu0
        %v666 = vadd.f32 %v590, %v665
        %v667 = vpop.f32.mrf.mxu0
        %668 = vmatprep.mubr.f32.mxu0 0.0
        %669 = vmatmul.mubr.f32.gmra.mxu0 %v597
        %v670 = vpop.f32.mrf.mxu0
        %v671 = vadd.f32 %v590, %v670
        %v672 = vpop.f32.mrf.mxu0
        %673 = vdwg.mxu0
        %674 = vst.msk [vmem:[%s205] sm:$0xff] %vm592, %v666
        %675 = vst.msk [vmem:[%s205 + $0x8] sm:$0xff] %vm592, %v671
        %s676 = sand.u32 %s120, 1
        %s677 = scalar_lea.sflag [#allocation3], %s676
        %s678 = sand.u32 %s120, 1
        %s679 = smul.addr %s678, 16
        %s680 = scalar_lea.vmem [#allocation2], %s679
        // Predicated region
        $region37: #{hetero_forecast_sage_forward.1} parent=35 // pred_check
          %p681 = pneg %p130
        $region38: #{hetero_forecast_sage_forward.1} parent=35 // pred_check_branch
          %683 = sbr.rel (%p681) target = $region40
        $region39: #{hetero_forecast_sage_forward.1} parent=35 // pred_region
          %s685 = ssub.s32 256, 256
          %686 = vsyncadd %s677, %s685
          %s687 = smul.addr %s18, 2
          %s688 = smul.addr %s687, 128
          %s689 = scalar_lea.hbm %s4, %s688
          %s690 = sshll.u32 %s680, 4
          %s691 = int_to_ptr.vmem [resolvable:$true] %s690
          %696 = dma.vmem_to_hbm [thread:$0]  %s691, 256, %s689, %s677, 128, 128, 8
        $region40: #{hetero_forecast_sage_forward.1} parent=35 // pred_fallthru
          _
      $region36: #{hetero_forecast_sage_forward.1} parent=5 // pred_fallthru
        _
      %p697 = scmp.le.s32.totalorder 2, %s13
      // Predicated region
      $region41: #{hetero_forecast_sage_forward.1} parent=5 // pred_check
        %p698 = pneg %p697
      $region42: #{hetero_forecast_sage_forward.1} parent=5 // pred_check_branch
        %700 = sbr.rel (%p698) target = $region44
      $region43: #{hetero_forecast_sage_forward.1} parent=5 // pred_region
        %s701 = ssub.s32 %s13, 2
        // Predicated region
        $region45: #{hetero_forecast_sage_forward.1} parent=43 // pred_check
          %p702 = pneg %p136
        $region46: #{hetero_forecast_sage_forward.1} parent=43 // pred_check_branch
          %704 = sbr.rel (%p702) target = $region48
        $region47: #{hetero_forecast_sage_forward.1} parent=43 // pred_region
          %s705 = sand.u32 %s121, 1
          %s706 = scalar_lea.sflag [#allocation3], %s705
          %s707 = sand.u32 %s121, 1
          %s708 = smul.addr %s707, 16
          %s709 = scalar_lea.vmem [#allocation2], %s708
          %710 = dma.done %s706, 256
        $region48: #{hetero_forecast_sage_forward.1} parent=43 // pred_fallthru
          _
      $region44: #{hetero_forecast_sage_forward.1} parent=5 // pred_fallthru
        _
    $region6: #{hetero_forecast_sage_forward.1} parent=1 // loop_footer
      %s17 = sadd.s32 1, %s13
    $region7: #{hetero_forecast_sage_forward.1} parent=1 // loop_footer_branch
      %12 = sbr.rel target = $region3
    $region8: #{hetero_forecast_sage_forward.1} parent=1 // loop_exit
      _
    %711 = vsyncpa [#allocation3], 1
    %s712 = scalar_lea.sflag [#allocation3], 1
    %713 = vsyncpa %s712, 1

</llo_original>
